<compile_context>
chip_gen: v7x
topology: tpu7x:2x2x1
jax: 0.10.0
libtpu: 0.0.40
codegen_flags: <defaults>
</compile_context>

<pallas_src>
import jax
import jax.numpy as jnp
import numpy as np
from jax.experimental import pallas as pl
from jax.experimental.pallas import tpu as pltpu


def _round_up(x: int, m: int) -> int:
    return ((x + m - 1) // m) * m


# ----------------------------- Pallas kernel --------------------------------
def _ensemble_fused_kernel(patches_ref, w1_ref, b1_ref, pool_ref, w2_ref, b2_ref,
                           out_ref):
    """Whole ensemble forward in one shot (all shapes pre-padded, lane-dense).

    patches_ref : (NL_pad, P_pad)     im2col'd input, shared by all members
    w1_ref      : (P_pad, MC_pad)     all conv weights fused along lanes (m*C+c)
    b1_ref      : (1, MC_pad)         all conv biases (zero-padded)
    pool_ref    : (N_pad, NL_pad)     block-diagonal 1/L_out pooling matrix
    w2_ref      : (MC_pad, T_pad)     block head weights, 1/M folded in
    b2_ref      : (1, T_pad)          mean head bias (zero-padded)
    out_ref     : (N_pad, T_pad)      lane-dense output, written exactly once
    """
    # Conv1d (valid) for all M members at once on the MXU.
    h = jnp.dot(patches_ref[...], w1_ref[...], preferred_element_type=jnp.float32)
    h = jnp.maximum(h + b1_ref[...], 0.0)                    # bias + ReLU (VPU)

    # Global average pool over L_out as a matmul -> (N_pad, MC_pad).
    pooled = jnp.dot(pool_ref[...], h, preferred_element_type=jnp.float32)

    # Per-member heads + ensemble mean as one block matmul -> (N_pad, T_pad).
    out_ref[...] = (
        jnp.dot(pooled, w2_ref[...], preferred_element_type=jnp.float32)
        + b2_ref[...]
    )


# ------------------------------ JAX wrapper ---------------------------------
@jax.jit
def model_wrapper_forward(x, conv_w, conv_b, head_w, head_b):
    """Equivalent of ModelWrapper.forward for an M-member ensemble.

    x       : (N, A, L)  float32
    conv_w  : (M, C, A, K)   (PyTorch Conv1d weight layout, per member)
    conv_b  : (M, C)
    head_w  : (M, T, C)      (PyTorch Linear weight layout, per member)
    head_b  : (M, T)
    returns : (N, T)
    """
    N, A, L = x.shape
    M, C, _, K = conv_w.shape
    T = head_w.shape[1]
    L_out = L - K + 1
    P = A * K
    MC = M * C
    NL = N * L_out

    # tile-friendly padded extents
    P_pad = _round_up(P, 8)        # contraction dim: sublane-aligned w1
    MC_pad = _round_up(MC, 128)    # lane-dense intermediate h / pooled
    T_pad = _round_up(T, 128)      # lane-dense output -> unmasked vst
    N_pad = _round_up(N, 8)        # sublane-aligned output rows
    NL_pad = _round_up(NL, 8)      # sublane-aligned patch rows

    x = x.astype(jnp.float32)

    # --- glue: im2col (N, A, L) -> (N*L_out, A*K); row index = n*L_out + l,
    #     column index = a*K + k, matching Conv1d weight flattening.
    # TODO(synk): for genomics-scale L, do the conv in-kernel as K unrolled
    # strided-slice matmuls instead of host-side im2col (avoids K-fold HBM/VMEM
    # inflation and lets patches be N-tiled for v7x's 64 MiB VMEM).
    patches = jnp.stack([x[:, :, l:l + K] for l in range(L_out)], axis=1)
    patches2d = patches.reshape(NL, P)
    patches_big = jnp.zeros((NL_pad, P_pad), jnp.float32).at[:NL, :P].set(patches2d)

    # --- glue: fuse the M conv weights along lanes, columns ordered (m*C + c).
    w1 = conv_w.reshape(M, C, P).transpose(2, 0, 1).reshape(P, MC).astype(jnp.float32)
    w1_big = jnp.zeros((P_pad, MC_pad), jnp.float32).at[:P, :MC].set(w1)
    b1_big = jnp.zeros((1, MC_pad), jnp.float32).at[0, :MC].set(
        conv_b.reshape(MC).astype(jnp.float32))

    # --- glue: block-diagonal pooling matrix, pooled[n] = mean_l h[n*L_out + l].
    row_batch = jnp.arange(NL, dtype=jnp.int32) // L_out
    pool = jax.nn.one_hot(row_batch, N, dtype=jnp.float32).T / np.float32(L_out)
    pool_big = jnp.zeros((N_pad, NL_pad), jnp.float32).at[:N, :NL].set(pool)

    # --- glue: per-member heads + ensemble mean as one block matrix, 1/M folded
    #     in, zero-padded so the kernel's single store is unmasked & lane-dense.
    w2 = head_w.transpose(0, 2, 1).reshape(MC, T).astype(jnp.float32) / np.float32(M)
    w2_big = jnp.zeros((MC_pad, T_pad), jnp.float32).at[:MC, :T].set(w2)
    b2_big = jnp.zeros((1, T_pad), jnp.float32).at[0, :T].set(
        head_b.mean(axis=0).astype(jnp.float32))

    grid_spec = pltpu.PrefetchScalarGridSpec(
        num_scalar_prefetch=0,
        grid=(1,),                                              # single step: no
        in_specs=[                                              # pipeline overhead
            pl.BlockSpec((NL_pad, P_pad), lambda i: (0, 0)),    # patches
            pl.BlockSpec((P_pad, MC_pad), lambda i: (0, 0)),    # fused conv weight
            pl.BlockSpec((1, MC_pad), lambda i: (0, 0)),        # fused conv bias
            pl.BlockSpec((N_pad, NL_pad), lambda i: (0, 0)),    # pooling matrix
            pl.BlockSpec((MC_pad, T_pad), lambda i: (0, 0)),    # fused head weight
            pl.BlockSpec((1, T_pad), lambda i: (0, 0)),         # mean head bias
        ],
        out_specs=pl.BlockSpec((N_pad, T_pad), lambda i: (0, 0)),
    )

    out_padded = pl.pallas_call(
        _ensemble_fused_kernel,
        grid_spec=grid_spec,
        out_shape=jax.ShapeDtypeStruct((N_pad, T_pad), jnp.float32),
        compiler_params=pltpu.CompilerParams(
            dimension_semantics=("arbitrary",),
        ),
    )(patches_big, w1_big, b1_big, pool_big, w2_big, b2_big)

    return out_padded[:N, :T]


# ---------------------------- pure-JAX reference -----------------------------
def _reference_forward(x, conv_w, conv_b, head_w, head_b):
    """Stack-then-mean ensemble forward, matching ModelWrapper.forward."""
    N, A, L = x.shape
    M, C, _, K = conv_w.shape
    L_out = L - K + 1
    patches = jnp.stack([x[:, :, l:l + K] for l in range(L_out)], axis=1)
    patches = patches.reshape(N, L_out, A * K)
    preds = []
    for m in range(M):
        h = jnp.einsum("nlp,cp->nlc", patches, conv_w[m].reshape(C, A * K)) + conv_b[m]
        h = jnp.maximum(h, 0.0)
        pooled = jnp.mean(h, axis=1)
        preds.append(pooled @ head_w[m].T + head_b[m])
    return jnp.mean(jnp.stack(preds, axis=0), axis=0)


# ---------------------------------- main -------------------------------------
if __name__ == "__main__":
    # small shapes implied by the module: x is (N, A, L) one-hot-like sequences
    N, A, L = 8, 4, 16          # batch, alphabet (DNA), sequence length
    C, K, T = 32, 5, 2          # conv channels, kernel width, tasks
    M = 3                       # ensemble size

    key = jax.random.PRNGKey(0)
    kx, kw1, kb1, kw2, kb2 = jax.random.split(key, 5)

    # deterministic synthetic inputs / parameters
    x = jax.random.uniform(kx, (N, A, L), dtype=jnp.float32)
    conv_w = 0.1 * jax.random.normal(kw1, (M, C, A, K), dtype=jnp.float32)
    conv_b = 0.1 * jax.random.normal(kb1, (M, C), dtype=jnp.float32)
    head_w = 0.1 * jax.random.normal(kw2, (M, T, C), dtype=jnp.float32)
    head_b = 0.1 * jax.random.normal(kb2, (M, T), dtype=jnp.float32)

    out = model_wrapper_forward(x, conv_w, conv_b, head_w, head_b)
    out = jax.block_until_ready(out)

    ref = _reference_forward(x, conv_w, conv_b, head_w, head_b)
    np.testing.assert_allclose(np.asarray(out), np.asarray(ref), rtol=1e-4, atol=1e-5)

    # TODO(synk): predict()/uncertainty() DataLoader batching and the abstract
    # uncertainty_method are host-side Python glue, not kernel compute.
    print("KERNEL_OK")
</pallas_src>

<mosaic_0001>
module attributes {stable_mosaic.version = 11 : i64} {
  func.func @_ensemble_fused_kernel(%arg0: i32, %arg1: memref<96x24xf32, #tpu.memory_space<vmem>>, %arg2: memref<24x128xf32, #tpu.memory_space<vmem>>, %arg3: memref<1x128xf32, #tpu.memory_space<vmem>>, %arg4: memref<8x96xf32, #tpu.memory_space<vmem>>, %arg5: memref<128x128xf32, #tpu.memory_space<vmem>>, %arg6: memref<1x128xf32, #tpu.memory_space<vmem>>, %arg7: memref<8x128xf32, #tpu.memory_space<vmem>>) attributes {dimension_semantics = [#tpu.dimension_semantics<arbitrary>], iteration_bounds = array<i64: 1>, scalar_prefetch = 0 : i64, scratch_operands = 0 : i64, tpu.core_type = #tpu.core_type<tc>, window_params = [{pipeline_mode = #tpu.pipeline_mode<synchronous>, transform_indices = @transform_0, window_bounds = array<i64: 96, 24>}, {pipeline_mode = #tpu.pipeline_mode<synchronous>, transform_indices = @transform_1, window_bounds = array<i64: 24, 128>}, {pipeline_mode = #tpu.pipeline_mode<synchronous>, transform_indices = @transform_2, window_bounds = array<i64: 1, 128>}, {pipeline_mode = #tpu.pipeline_mode<synchronous>, transform_indices = @transform_3, window_bounds = array<i64: 8, 96>}, {pipeline_mode = #tpu.pipeline_mode<synchronous>, transform_indices = @transform_4, window_bounds = array<i64: 128, 128>}, {pipeline_mode = #tpu.pipeline_mode<synchronous>, transform_indices = @transform_5, window_bounds = array<i64: 1, 128>}, {pipeline_mode = #tpu.pipeline_mode<synchronous>, transform_indices = @transform_6, window_bounds = array<i64: 8, 128>}]} {
    %c0 = arith.constant 0 : index
    %c0_0 = arith.constant 0 : index
    %0 = vector.load %arg1[%c0, %c0_0] : memref<96x24xf32, #tpu.memory_space<vmem>>, vector<96x24xf32>
    %c0_1 = arith.constant 0 : index
    %c0_2 = arith.constant 0 : index
    %1 = vector.load %arg2[%c0_1, %c0_2] : memref<24x128xf32, #tpu.memory_space<vmem>>, vector<24x128xf32>
    %cst = arith.constant dense<0.000000e+00> : vector<96x128xf32>
    %2 = tpu.matmul %0, %1, %cst {dimension_numbers = #tpu.dot_dimension_numbers<[1], [0], [0], [1], [0, 0, 1, 1], [], []>} : vector<96x24xf32>, vector<24x128xf32>, vector<96x128xf32> -> vector<96x128xf32>
    %c0_3 = arith.constant 0 : index
    %c0_4 = arith.constant 0 : index
    %3 = vector.load %arg3[%c0_3, %c0_4] : memref<1x128xf32, #tpu.memory_space<vmem>>, vector<1x128xf32>
    %4 = vector.broadcast %3 : vector<1x128xf32> to vector<96x128xf32>
    %5 = arith.addf %2, %4 : vector<96x128xf32>
    %cst_5 = arith.constant 0.000000e+00 : f32
    %6 = vector.broadcast %cst_5 : f32 to vector<96x128xf32>
    %7 = arith.maximumf %5, %6 : vector<96x128xf32>
    %c0_6 = arith.constant 0 : index
    %c0_7 = arith.constant 0 : index
    %8 = vector.load %arg4[%c0_6, %c0_7] : memref<8x96xf32, #tpu.memory_space<vmem>>, vector<8x96xf32>
    %cst_8 = arith.constant dense<0.000000e+00> : vector<8x128xf32>
    %9 = tpu.matmul %8, %7, %cst_8 {dimension_numbers = #tpu.dot_dimension_numbers<[1], [0], [0], [1], [0, 0, 1, 1], [], []>} : vector<8x96xf32>, vector<96x128xf32>, vector<8x128xf32> -> vector<8x128xf32>
    %c0_9 = arith.constant 0 : index
    %c0_10 = arith.constant 0 : index
    %10 = vector.load %arg5[%c0_9, %c0_10] : memref<128x128xf32, #tpu.memory_space<vmem>>, vector<128x128xf32>
    %cst_11 = arith.constant dense<0.000000e+00> : vector<8x128xf32>
    %11 = tpu.matmul %9, %10, %cst_11 {dimension_numbers = #tpu.dot_dimension_numbers<[1], [0], [0], [1], [0, 0, 1, 1], [], []>} : vector<8x128xf32>, vector<128x128xf32>, vector<8x128xf32> -> vector<8x128xf32>
    %c0_12 = arith.constant 0 : index
    %c0_13 = arith.constant 0 : index
    %12 = vector.load %arg6[%c0_12, %c0_13] : memref<1x128xf32, #tpu.memory_space<vmem>>, vector<1x128xf32>
    %13 = vector.broadcast %12 : vector<1x128xf32> to vector<8x128xf32>
    %14 = arith.addf %11, %13 : vector<8x128xf32>
    %c0_14 = arith.constant 0 : index
    %c0_15 = arith.constant 0 : index
    %15 = vector.load %arg7[%c0_14, %c0_15] : memref<8x128xf32, #tpu.memory_space<vmem>>, vector<8x128xf32>
    tpu.vector_store %arg7[%c0_14, %c0_15], %14 {strides = array<i32>} : memref<8x128xf32, #tpu.memory_space<vmem>>, vector<8x128xf32>,
    return
  }
  func.func @transform_0(%arg0: i32) -> (i32, i32) {
    %c0_i32 = arith.constant 0 : i32
    %c0_i32_0 = arith.constant 0 : i32
    %c0_i32_1 = arith.constant 0 : i32
    return %c0_i32, %c0_i32_0 : i32, i32
  }
  func.func @transform_1(%arg0: i32) -> (i32, i32) {
    %c0_i32 = arith.constant 0 : i32
    %c0_i32_0 = arith.constant 0 : i32
    %c0_i32_1 = arith.constant 0 : i32
    return %c0_i32, %c0_i32_0 : i32, i32
  }
  func.func @transform_2(%arg0: i32) -> (i32, i32) {
    %c0_i32 = arith.constant 0 : i32
    %c0_i32_0 = arith.constant 0 : i32
    %c0_i32_1 = arith.constant 0 : i32
    return %c0_i32, %c0_i32_0 : i32, i32
  }
  func.func @transform_3(%arg0: i32) -> (i32, i32) {
    %c0_i32 = arith.constant 0 : i32
    %c0_i32_0 = arith.constant 0 : i32
    %c0_i32_1 = arith.constant 0 : i32
    return %c0_i32, %c0_i32_0 : i32, i32
  }
  func.func @transform_4(%arg0: i32) -> (i32, i32) {
    %c0_i32 = arith.constant 0 : i32
    %c0_i32_0 = arith.constant 0 : i32
    %c0_i32_1 = arith.constant 0 : i32
    return %c0_i32, %c0_i32_0 : i32, i32
  }
  func.func @transform_5(%arg0: i32) -> (i32, i32) {
    %c0_i32 = arith.constant 0 : i32
    %c0_i32_0 = arith.constant 0 : i32
    %c0_i32_1 = arith.constant 0 : i32
    return %c0_i32, %c0_i32_0 : i32, i32
  }
  func.func @transform_6(%arg0: i32) -> (i32, i32) {
    %c0_i32 = arith.constant 0 : i32
    %c0_i32_0 = arith.constant 0 : i32
    %c0_i32_1 = arith.constant 0 : i32
    return %c0_i32, %c0_i32_0 : i32, i32
  }
}

</mosaic_0001>

<llo_original>
// kernel: model_wrapper_forward.1
$region0: #{model_wrapper_forward.1}
  #allocation0 [shape = 'u32[]', space=smem, size = 0x4, offset = 0x4, fixed_abs, tag = 'smem constant byte address 0x4 - core index']
  #allocation1 [shape = 'u32[144,128]{1,0:T(1,128)}', space=vmem, size = 0x12000, scoped, tag = 'internal scratch']
  %s0 = inlined_call_operand.vmem [shape: f32[96,24], index: 0, kind: input, shape index: {}]
  %s1 = inlined_call_operand.vmem [shape: f32[24,128], index: 1, kind: input, shape index: {}]
  %s2 = inlined_call_operand.vmem [shape: f32[1,128], index: 2, kind: input, shape index: {}]
  %s3 = inlined_call_operand.vmem [shape: f32[8,96], index: 3, kind: input, shape index: {}]
  %s4 = inlined_call_operand.vmem [shape: f32[128,128], index: 4, kind: input, shape index: {}]
  %s5 = inlined_call_operand.vmem [shape: f32[1,128], index: 5, kind: input, shape index: {}]
  %s6 = inlined_call_operand.vmem [shape: f32[8,128], index: 6, kind: output, shape index: {}]
  %s7 = sld [smem:[#allocation0]]
  $region34: #{model_wrapper_forward.1} parent=0
    _
  %s9 = ssub.s32 1, %s7
  %s10 = scalar_select 0, %s9, %s7
  // Predicated region
  $region2: #{model_wrapper_forward.1} parent=0 // pred_check
    _
  $region3: #{model_wrapper_forward.1} parent=0 // pred_check_branch
    %12 = sbr.rel (0) target = $region5
  $region4: #{model_wrapper_forward.1} parent=0 // pred_region
    _
  $region5: #{model_wrapper_forward.1} parent=0 // pred_fallthru
    _
  // Predicated region
  $region6: #{model_wrapper_forward.1} parent=0 // pred_check
    _
  $region7: #{model_wrapper_forward.1} parent=0 // pred_check_branch
    %14 = sbr.rel (0) target = $region9
  $region8: #{model_wrapper_forward.1} parent=0 // pred_region
    _
  $region9: #{model_wrapper_forward.1} parent=0 // pred_fallthru
    _
  // Predicated region
  $region10: #{model_wrapper_forward.1} parent=0 // pred_check
    _
  $region11: #{model_wrapper_forward.1} parent=0 // pred_check_branch
    %16 = sbr.rel (0) target = $region13
  $region12: #{model_wrapper_forward.1} parent=0 // pred_region
    _
  $region13: #{model_wrapper_forward.1} parent=0 // pred_fallthru
    _
  // Predicated region
  $region14: #{model_wrapper_forward.1} parent=0 // pred_check
    _
  $region15: #{model_wrapper_forward.1} parent=0 // pred_check_branch
    %18 = sbr.rel (0) target = $region17
  $region16: #{model_wrapper_forward.1} parent=0 // pred_region
    _
  $region17: #{model_wrapper_forward.1} parent=0 // pred_fallthru
    _
  // Predicated region
  $region18: #{model_wrapper_forward.1} parent=0 // pred_check
    _
  $region19: #{model_wrapper_forward.1} parent=0 // pred_check_branch
    %20 = sbr.rel (0) target = $region21
  $region20: #{model_wrapper_forward.1} parent=0 // pred_region
    _
  $region21: #{model_wrapper_forward.1} parent=0 // pred_fallthru
    _
  // Predicated region
  $region22: #{model_wrapper_forward.1} parent=0 // pred_check
    _
  $region23: #{model_wrapper_forward.1} parent=0 // pred_check_branch
    %22 = sbr.rel (0) target = $region25
  $region24: #{model_wrapper_forward.1} parent=0 // pred_region
    _
  $region25: #{model_wrapper_forward.1} parent=0 // pred_fallthru
    _
  %v23 = vld [vmem:[%s0] sm:$0xff]
  %v24 = vld [vmem:[%s0 + $0x8] sm:$0xff]
  %v25 = vld [vmem:[%s0 + $0x10] sm:$0xff]
  %v26 = vld [vmem:[%s0 + $0x18] sm:$0xff]
  %v27 = vld [vmem:[%s0 + $0x20] sm:$0xff]
  %v28 = vld [vmem:[%s0 + $0x28] sm:$0xff]
  %v29 = vld [vmem:[%s0 + $0x30] sm:$0xff]
  %v30 = vld [vmem:[%s0 + $0x38] sm:$0xff]
  %v31 = vld [vmem:[%s0 + $0x40] sm:$0xff]
  %v32 = vld [vmem:[%s0 + $0x48] sm:$0xff]
  %v33 = vld [vmem:[%s0 + $0x50] sm:$0xff]
  %v34 = vld [vmem:[%s0 + $0x58] sm:$0xff]
  %v35 = vld [vmem:[%s1] sm:$0xff]
  %v36 = vld [vmem:[%s1 + $0x8] sm:$0xff]
  %v37 = vld [vmem:[%s1 + $0x10] sm:$0xff]
  %v38 = vld [vmem:[%s2] sm:$0x1]
  %v40 = vlaneseq
  %v41 = vshrl.u32 %v40, 7
  %v42 = vsub.s32 0, %v41
  %v43 = vrot.slane %v38, %v42
  %vm45 = vcmask 195584
  %v47 = vsel %vm45, %v23, 0
  %v50 = vsel %vm45, %v24, 0
  %v53 = vsel %vm45, %v25, 0
  %v56 = vsel %vm45, %v26, 0
  %v59 = vsel %vm45, %v27, 0
  %v62 = vsel %vm45, %v28, 0
  %v65 = vsel %vm45, %v29, 0
  %v68 = vsel %vm45, %v30, 0
  %v71 = vsel %vm45, %v31, 0
  %v74 = vsel %vm45, %v32, 0
  %v77 = vsel %vm45, %v33, 0
  %v80 = vsel %vm45, %v34, 0
  %82 = vmatprep.subr.mxu0 0.0
  %83 = vmatpush1.msra.mxu0 %v35
  %84 = vmatprep.subr.mxu0 0.0
  %85 = vmatpush1.msra.mxu0 %v36
  %86 = vmatprep.subr.mxu0 0.0
  %87 = vmatpush1.msra.mxu0 %v37
  %88 = vmatprep.subr.mxu0 0.0
  %89 = vmatpush1.msra.mxu0 0.0
  %90 = vmatprep.subr.mxu0 0.0
  %91 = vmatpush1.msra.mxu0 0.0
  %92 = vmatprep.subr.mxu0 0.0
  %93 = vmatpush1.msra.mxu0 0.0
  %94 = vmatprep.subr.mxu0 0.0
  %95 = vmatpush1.msra.mxu0 0.0
  %96 = vmatprep.subr.mxu0 0.0
  %97 = vmatpush1.msra.mxu0 0.0
  %98 = vmatprep.subr.mxu0 0.0
  %99 = vmatpush1.msra.mxu0 0.0
  %100 = vmatprep.subr.mxu0 0.0
  %101 = vmatpush1.msra.mxu0 0.0
  %102 = vmatprep.subr.mxu0 0.0
  %103 = vmatpush1.msra.mxu0 0.0
  %104 = vmatprep.subr.mxu0 0.0
  %105 = vmatpush1.msra.mxu0 0.0
  %106 = vmatprep.subr.mxu0 0.0
  %107 = vmatpush1.msra.mxu0 0.0
  %108 = vmatprep.subr.mxu0 0.0
  %109 = vmatpush1.msra.mxu0 0.0
  %110 = vmatprep.subr.mxu0 0.0
  %111 = vmatpush1.msra.mxu0 0.0
  %112 = vmatprep.subr.mxu0 0.0
  %113 = vmatpush1.msra.mxu0 0.0
  %114 = vmatprep.subr.mxu0 0.0
  %115 = vmatpush1.msra.mxu0 0.0
  %116 = vmatprep.subr.mxu0 0.0
  %117 = vmatpush1.msra.mxu0 0.0
  %118 = vmatprep.subr.mxu0 0.0
  %119 = vmatpush1.msra.mxu0 0.0
  %120 = vmatprep.subr.mxu0 0.0
  %121 = vmatpush1.msra.mxu0 0.0
  %122 = vmatprep.subr.mxu0 0.0
  %123 = vmatpush1.msra.mxu0 0.0
  %124 = vmatprep.subr.mxu0 0.0
  %125 = vmatpush1.msra.mxu0 0.0
  %126 = vmatprep.subr.mxu0 0.0
  %127 = vmatpush1.msra.mxu0 0.0
  %128 = vmatprep.subr.mxu0 0.0
  %129 = vmatpush1.msra.mxu0 0.0
  %130 = vmatprep.subr.mxu0 0.0
  %131 = vmatpush1.msra.mxu0 0.0
  %132 = vmatprep.subr.mxu0 0.0
  %133 = vmatpush1.msra.mxu0 0.0
  %134 = vmatprep.subr.mxu0 0.0
  %135 = vmatpush1.msra.mxu0 0.0
  %136 = vmatprep.subr.mxu0 0.0
  %137 = vmatpush1.msra.mxu0 0.0
  %138 = vmatprep.subr.mxu0 0.0
  %139 = vmatpush1.msra.mxu0 0.0
  %140 = vmatprep.subr.mxu0 0.0
  %141 = vmatpush1.msra.mxu0 0.0
  %142 = vmatprep.subr.mxu0 0.0
  %143 = vmatpush1.msra.mxu0 0.0
  %144 = vmatprep.subr.mxu0 0.0
  %145 = vmatpush1.msra.mxu0 0.0
  %146 = vmatprep.mubr.f32.mxu0 0.0
  %147 = vmatmul.mubr.f32.gmra.mrb[0].mxu0 %v47
  %v148 = vpop.f32.mrb[0].mxu0
  %v149 = vadd.f32 %v43, %v148
  %v150 = vpop.f32.mrb[0].mxu0
  %151 = vmatprep.mubr.f32.mxu0 0.0
  %152 = vmatmul.mubr.f32.gmra.mrb[0].mxu0 %v50
  %v153 = vpop.f32.mrb[0].mxu0
  %v154 = vadd.f32 %v43, %v153
  %v155 = vpop.f32.mrb[0].mxu0
  %156 = vmatprep.mubr.f32.mxu0 0.0
  %157 = vmatmul.mubr.f32.gmra.mrb[0].mxu0 %v53
  %v158 = vpop.f32.mrb[0].mxu0
  %v159 = vadd.f32 %v43, %v158
  %v160 = vpop.f32.mrb[0].mxu0
  %161 = vmatprep.mubr.f32.mxu0 0.0
  %162 = vmatmul.mubr.f32.gmra.mrb[0].mxu0 %v56
  %v163 = vpop.f32.mrb[0].mxu0
  %v164 = vadd.f32 %v43, %v163
  %v165 = vpop.f32.mrb[0].mxu0
  %166 = vmatprep.mubr.f32.mxu0 0.0
  %167 = vmatmul.mubr.f32.gmra.mrb[0].mxu0 %v59
  %v168 = vpop.f32.mrb[0].mxu0
  %v169 = vadd.f32 %v43, %v168
  %v170 = vpop.f32.mrb[0].mxu0
  %171 = vmatprep.mubr.f32.mxu0 0.0
  %172 = vmatmul.mubr.f32.gmra.mrb[0].mxu0 %v62
  %v173 = vpop.f32.mrb[0].mxu0
  %v174 = vadd.f32 %v43, %v173
  %v175 = vpop.f32.mrb[0].mxu0
  %176 = vmatprep.mubr.f32.mxu0 0.0
  %177 = vmatmul.mubr.f32.gmra.mrb[0].mxu0 %v65
  %v178 = vpop.f32.mrb[0].mxu0
  %v179 = vadd.f32 %v43, %v178
  %v180 = vpop.f32.mrb[0].mxu0
  %181 = vmatprep.mubr.f32.mxu0 0.0
  %182 = vmatmul.mubr.f32.gmra.mrb[0].mxu0 %v68
  %v183 = vpop.f32.mrb[0].mxu0
  %v184 = vadd.f32 %v43, %v183
  %v185 = vpop.f32.mrb[0].mxu0
  %186 = vmatprep.mubr.f32.mxu0 0.0
  %187 = vmatmul.mubr.f32.gmra.mrb[0].mxu0 %v71
  %v188 = vpop.f32.mrb[0].mxu0
  %v189 = vadd.f32 %v43, %v188
  %v190 = vpop.f32.mrb[0].mxu0
  %191 = vmatprep.mubr.f32.mxu0 0.0
  %192 = vmatmul.mubr.f32.gmra.mrb[0].mxu0 %v74
  %v193 = vpop.f32.mrb[0].mxu0
  %v194 = vadd.f32 %v43, %v193
  %v195 = vpop.f32.mrb[0].mxu0
  %196 = vmatprep.mubr.f32.mxu0 0.0
  %197 = vmatmul.mubr.f32.gmra.mrb[0].mxu0 %v77
  %v198 = vpop.f32.mrb[0].mxu0
  %v199 = vadd.f32 %v43, %v198
  %v200 = vpop.f32.mrb[0].mxu0
  %201 = vmatprep.mubr.f32.mxu0 0.0
  %202 = vmatmul.mubr.f32.gmra.mrb[0].mxu0 %v80
  %v203 = vpop.f32.mrb[0].mxu0
  %v204 = vadd.f32 %v43, %v203
  %v205 = vpop.f32.mrb[0].mxu0
  %206 = vdwg.mxu0
  %v207 = vmax.f32 %v149, 0.0
  %v208 = vmax.f32 %v154, 0.0
  %v209 = vmax.f32 %v159, 0.0
  %v210 = vmax.f32 %v164, 0.0
  %v211 = vmax.f32 %v169, 0.0
  %v212 = vmax.f32 %v174, 0.0
  %v213 = vmax.f32 %v179, 0.0
  %v214 = vmax.f32 %v184, 0.0
  %v215 = vmax.f32 %v189, 0.0
  %v216 = vmax.f32 %v194, 0.0
  %v217 = vmax.f32 %v199, 0.0
  %v218 = vmax.f32 %v204, 0.0
  %v219 = vld [vmem:[%s3] sm:$0xff]
  %vm220 = vcmask 785408
  %v222 = vsel %vm220, %v219, 0
  %224 = vmatprep.subr.mxu0 0.0
  %225 = vmatpush1.msra.mxu0 %v207
  %226 = vmatprep.subr.mxu0 0.0
  %227 = vmatpush1.msra.mxu0 %v208
  %228 = vmatprep.subr.mxu0 0.0
  %229 = vmatpush1.msra.mxu0 %v209
  %230 = vmatprep.subr.mxu0 0.0
  %231 = vmatpush1.msra.mxu0 %v210
  %232 = vmatprep.subr.mxu0 0.0
  %233 = vmatpush1.msra.mxu0 %v211
  %234 = vmatprep.subr.mxu0 0.0
  %235 = vmatpush1.msra.mxu0 %v212
  %236 = vmatprep.subr.mxu0 0.0
  %237 = vmatpush1.msra.mxu0 %v213
  %238 = vmatprep.subr.mxu0 0.0
  %239 = vmatpush1.msra.mxu0 %v214
  %240 = vmatprep.subr.mxu0 0.0
  %241 = vmatpush1.msra.mxu0 %v215
  %242 = vmatprep.subr.mxu0 0.0
  %243 = vmatpush1.msra.mxu0 %v216
  %244 = vmatprep.subr.mxu0 0.0
  %245 = vmatpush1.msra.mxu0 %v217
  %246 = vmatprep.subr.mxu0 0.0
  %247 = vmatpush1.msra.mxu0 %v218
  %248 = vmatprep.subr.mxu0 0.0
  %249 = vmatpush1.msra.mxu0 0.0
  %250 = vmatprep.subr.mxu0 0.0
  %251 = vmatpush1.msra.mxu0 0.0
  %252 = vmatprep.subr.mxu0 0.0
  %253 = vmatpush1.msra.mxu0 0.0
  %254 = vmatprep.subr.mxu0 0.0
  %255 = vmatpush1.msra.mxu0 0.0
  %256 = vmatprep.subr.mxu0 0.0
  %257 = vmatpush1.msra.mxu0 0.0
  %258 = vmatprep.subr.mxu0 0.0
  %259 = vmatpush1.msra.mxu0 0.0
  %260 = vmatprep.subr.mxu0 0.0
  %261 = vmatpush1.msra.mxu0 0.0
  %262 = vmatprep.subr.mxu0 0.0
  %263 = vmatpush1.msra.mxu0 0.0
  %264 = vmatprep.subr.mxu0 0.0
  %265 = vmatpush1.msra.mxu0 0.0
  %266 = vmatprep.subr.mxu0 0.0
  %267 = vmatpush1.msra.mxu0 0.0
  %268 = vmatprep.subr.mxu0 0.0
  %269 = vmatpush1.msra.mxu0 0.0
  %270 = vmatprep.subr.mxu0 0.0
  %271 = vmatpush1.msra.mxu0 0.0
  %272 = vmatprep.subr.mxu0 0.0
  %273 = vmatpush1.msra.mxu0 0.0
  %274 = vmatprep.subr.mxu0 0.0
  %275 = vmatpush1.msra.mxu0 0.0
  %276 = vmatprep.subr.mxu0 0.0
  %277 = vmatpush1.msra.mxu0 0.0
  %278 = vmatprep.subr.mxu0 0.0
  %279 = vmatpush1.msra.mxu0 0.0
  %280 = vmatprep.subr.mxu0 0.0
  %281 = vmatpush1.msra.mxu0 0.0
  %282 = vmatprep.subr.mxu0 0.0
  %283 = vmatpush1.msra.mxu0 0.0
  %284 = vmatprep.subr.mxu0 0.0
  %285 = vmatpush1.msra.mxu0 0.0
  %286 = vmatprep.subr.mxu0 0.0
  %287 = vmatpush1.msra.mxu0 0.0
  %288 = vmatprep.mubr.f32.mxu0 0.0
  %289 = vmatmul.mubr.f32.gmra.mrb[0].mxu0 %v222
  %v290 = vpop.f32.mrb[0].mxu0
  %v291 = vadd.f32 0.0, %v290
  %v292 = vpop.f32.mrb[0].mxu0
  %293 = vdwg.mxu0
  %v294 = vld [vmem:[%s4] sm:$0xff]
  %v295 = vld [vmem:[%s4 + $0x8] sm:$0xff]
  %v296 = vld [vmem:[%s4 + $0x10] sm:$0xff]
  %v297 = vld [vmem:[%s4 + $0x18] sm:$0xff]
  %v298 = vld [vmem:[%s4 + $0x20] sm:$0xff]
  %v299 = vld [vmem:[%s4 + $0x28] sm:$0xff]
  %v300 = vld [vmem:[%s4 + $0x30] sm:$0xff]
  %v301 = vld [vmem:[%s4 + $0x38] sm:$0xff]
  %v302 = vld [vmem:[%s4 + $0x40] sm:$0xff]
  %v303 = vld [vmem:[%s4 + $0x48] sm:$0xff]
  %v304 = vld [vmem:[%s4 + $0x50] sm:$0xff]
  %v305 = vld [vmem:[%s4 + $0x58] sm:$0xff]
  %v306 = vld [vmem:[%s4 + $0x60] sm:$0xff]
  %v307 = vld [vmem:[%s4 + $0x68] sm:$0xff]
  %v308 = vld [vmem:[%s4 + $0x70] sm:$0xff]
  %v309 = vld [vmem:[%s4 + $0x78] sm:$0xff]
  %v310 = vld [vmem:[%s5] sm:$0x1]
  %v312 = vlaneseq
  %v313 = vshrl.u32 %v312, 7
  %v314 = vsub.s32 0, %v313
  %v315 = vrot.slane %v310, %v314
  %317 = vmatprep.subr.mxu0 0.0
  %318 = vmatpush1.msra.mxu0 %v294
  %319 = vmatprep.subr.mxu0 0.0
  %320 = vmatpush1.msra.mxu0 %v295
  %321 = vmatprep.subr.mxu0 0.0
  %322 = vmatpush1.msra.mxu0 %v296
  %323 = vmatprep.subr.mxu0 0.0
  %324 = vmatpush1.msra.mxu0 %v297
  %325 = vmatprep.subr.mxu0 0.0
  %326 = vmatpush1.msra.mxu0 %v298
  %327 = vmatprep.subr.mxu0 0.0
  %328 = vmatpush1.msra.mxu0 %v299
  %329 = vmatprep.subr.mxu0 0.0
  %330 = vmatpush1.msra.mxu0 %v300
  %331 = vmatprep.subr.mxu0 0.0
  %332 = vmatpush1.msra.mxu0 %v301
  %333 = vmatprep.subr.mxu0 0.0
  %334 = vmatpush1.msra.mxu0 %v302
  %335 = vmatprep.subr.mxu0 0.0
  %336 = vmatpush1.msra.mxu0 %v303
  %337 = vmatprep.subr.mxu0 0.0
  %338 = vmatpush1.msra.mxu0 %v304
  %339 = vmatprep.subr.mxu0 0.0
  %340 = vmatpush1.msra.mxu0 %v305
  %341 = vmatprep.subr.mxu0 0.0
  %342 = vmatpush1.msra.mxu0 %v306
  %343 = vmatprep.subr.mxu0 0.0
  %344 = vmatpush1.msra.mxu0 %v307
  %345 = vmatprep.subr.mxu0 0.0
  %346 = vmatpush1.msra.mxu0 %v308
  %347 = vmatprep.subr.mxu0 0.0
  %348 = vmatpush1.msra.mxu0 %v309
  %349 = vmatprep.subr.mxu0 0.0
  %350 = vmatpush1.msra.mxu0 0.0
  %351 = vmatprep.subr.mxu0 0.0
  %352 = vmatpush1.msra.mxu0 0.0
  %353 = vmatprep.subr.mxu0 0.0
  %354 = vmatpush1.msra.mxu0 0.0
  %355 = vmatprep.subr.mxu0 0.0
  %356 = vmatpush1.msra.mxu0 0.0
  %357 = vmatprep.subr.mxu0 0.0
  %358 = vmatpush1.msra.mxu0 0.0
  %359 = vmatprep.subr.mxu0 0.0
  %360 = vmatpush1.msra.mxu0 0.0
  %361 = vmatprep.subr.mxu0 0.0
  %362 = vmatpush1.msra.mxu0 0.0
  %363 = vmatprep.subr.mxu0 0.0
  %364 = vmatpush1.msra.mxu0 0.0
  %365 = vmatprep.subr.mxu0 0.0
  %366 = vmatpush1.msra.mxu0 0.0
  %367 = vmatprep.subr.mxu0 0.0
  %368 = vmatpush1.msra.mxu0 0.0
  %369 = vmatprep.subr.mxu0 0.0
  %370 = vmatpush1.msra.mxu0 0.0
  %371 = vmatprep.subr.mxu0 0.0
  %372 = vmatpush1.msra.mxu0 0.0
  %373 = vmatprep.subr.mxu0 0.0
  %374 = vmatpush1.msra.mxu0 0.0
  %375 = vmatprep.subr.mxu0 0.0
  %376 = vmatpush1.msra.mxu0 0.0
  %377 = vmatprep.subr.mxu0 0.0
  %378 = vmatpush1.msra.mxu0 0.0
  %379 = vmatprep.subr.mxu0 0.0
  %380 = vmatpush1.msra.mxu0 0.0
  %381 = vmatprep.mubr.f32.mxu0 0.0
  %382 = vmatmul.mubr.f32.gmra.mrb[0].mxu0 %v291
  %v383 = vpop.f32.mrb[0].mxu0
  %v384 = vadd.f32 %v315, %v383
  %v385 = vpop.f32.mrb[0].mxu0
  %386 = vdwg.mxu0
  %387 = vst [vmem:[%s6] sm:$0xff] %v384
  // Predicated region
  $region26: #{model_wrapper_forward.1} parent=0 // pred_check
    _
  $region27: #{model_wrapper_forward.1} parent=0 // pred_check_branch
    %389 = sbr.rel (0) target = $region29
  $region28: #{model_wrapper_forward.1} parent=0 // pred_region
    _
  $region29: #{model_wrapper_forward.1} parent=0 // pred_fallthru
    _
  // Predicated region
  $region30: #{model_wrapper_forward.1} parent=0 // pred_check
    _
  $region31: #{model_wrapper_forward.1} parent=0 // pred_check_branch
    %391 = sbr.rel (0) target = $region33
  $region32: #{model_wrapper_forward.1} parent=0 // pred_region
    _
  $region33: #{model_wrapper_forward.1} parent=0 // pred_fallthru
    _

</llo_original>
